<compile_context>
chip_gen: v7x
topology: tpu7x:2x2x1
jax: 0.10.0
libtpu: 0.0.40
codegen_flags: <defaults>
</compile_context>

<pallas_src>
import math
import jax
import jax.numpy as jnp
from jax import lax
from jax.experimental import pallas as pl
from jax.experimental.pallas import tpu as pltpu


def _td_matmul_kernel(d_ref, w_ref, b_ref, o_ref):
    # d_ref: (TB, I), w_ref: (O, I), b_ref: (1, O), o_ref: (TB, O)
    # Contract on W's axis 1 in-kernel so no transposed weight copy is needed.
    z = lax.dot_general(
        d_ref[...], w_ref[...],
        dimension_numbers=(((1,), (1,)), ((), ())),
        preferred_element_type=jnp.float32)
    z = z + b_ref[...].astype(jnp.float32)        # bias broadcast over rows
    o_ref[...] = jnp.exp(-jnp.maximum(z, 0.0)).astype(o_ref.dtype)


def _td_diag_kernel(d_ref, w_ref, b_ref, o_ref):
    # diag path: gamma = exp(-relu(d * diag(W) + b)) — one vmul+vadd+max per
    # vreg plus the EUP exp; no MXU, no identity materialization.
    z = (d_ref[...].astype(jnp.float32) * w_ref[...].astype(jnp.float32)
         + b_ref[...].astype(jnp.float32))
    o_ref[...] = jnp.exp(-jnp.maximum(z, 0.0)).astype(o_ref.dtype)


def temporal_decay(d, W, b, diag=False, block_rows=512):
    """gamma = exp(-relu(d @ W.T + b)), optionally masking W to its diagonal.

    d: [..., input_size], W: [output_size, input_size], b: [output_size].
    Leading dims of d are flattened into one row slab so e.g. a [B, T, I]
    sequence is processed in a single pallas_call.
    """
    input_size = d.shape[-1]
    output_size = W.shape[0]
    lead_shape = d.shape[:-1]

    d2 = d.reshape(-1, input_size)
    n = d2.shape[0]

    # Row tiling: full slab (grid=(1,)) when small; otherwise 8-aligned row
    # tiles that pipeline d/out against compute and shard across TCs on v7x.
    if n <= block_rows:
        tb = n
        n_pad = n
    else:
        tb = max(8, (min(block_rows, n) // 8) * 8)
        n_pad = pl.cdiv(n, tb) * tb
        if n_pad != n:
            d2 = jnp.pad(d2, ((0, n_pad - n), (0, 0)))

    grid = (n_pad // tb,)
    out_dtype = d.dtype
    b2 = b.reshape(1, output_size)

    if diag:
        assert input_size == output_size
        # Only diagonal(W) participates: a row-wise scale, no MXU needed.
        w_arg = jnp.diagonal(W).reshape(1, input_size)
        w_spec = pl.BlockSpec((1, input_size), lambda i: (0, 0))
        kernel = _td_diag_kernel
    else:
        w_arg = W                                  # (O, I); contracted on axis 1
        w_spec = pl.BlockSpec((output_size, input_size), lambda i: (0, 0))
        kernel = _td_matmul_kernel

    out = pl.pallas_call(
        kernel,
        out_shape=jax.ShapeDtypeStruct((n_pad, output_size), out_dtype),
        grid=grid,
        in_specs=[
            pl.BlockSpec((tb, input_size), lambda i: (i, 0)),   # row tile of d
            w_spec,                                             # weights (resident)
            pl.BlockSpec((1, output_size), lambda i: (0, 0)),   # bias (resident)
        ],
        out_specs=pl.BlockSpec((tb, output_size), lambda i: (i, 0)),
        compiler_params=pltpu.CompilerParams(
            dimension_semantics=("parallel",),        # rows independent -> both TCs on v7x
            vmem_limit_bytes=64 * 1024 * 1024),       # within v7x's 64 MiB physical VMEM
    )(d2, w_arg, b2)

    out = out[:n]
    return out.reshape(*lead_shape, output_size)


def _reference(d, W, b, diag=False):
    Wm = W * jnp.eye(W.shape[0], dtype=W.dtype) if diag else W
    gamma = jnp.maximum(jnp.einsum("...i,oi->...o", d, Wm) + b, 0.0)
    return jnp.exp(-gamma)


if __name__ == "__main__":
    key = jax.random.PRNGKey(0)
    k_d, k_w, k_b, k_seq = jax.random.split(key, 4)

    batch = 8
    input_size = 32
    output_size = 32

    # Deterministic parameter init mirroring reset_parameters():
    # stdv = 1/sqrt(output_size); W, b ~ U(-stdv, stdv)
    stdv = 1.0 / math.sqrt(output_size)
    W = jax.random.uniform(k_w, (output_size, input_size),
                           minval=-stdv, maxval=stdv, dtype=jnp.float32)
    b = jax.random.uniform(k_b, (output_size,),
                           minval=-stdv, maxval=stdv, dtype=jnp.float32)

    # d = time-delta style nonnegative input
    d = jax.random.uniform(k_d, (batch, input_size),
                           minval=0.0, maxval=5.0, dtype=jnp.float32)

    ok = True

    # 2-D input, both diag modes.
    for diag in (False, True):
        out = jax.block_until_ready(temporal_decay(d, W, b, diag=diag))
        ref = _reference(d, W, b, diag=diag)
        ok = ok and bool(jnp.allclose(out, ref, atol=1e-5, rtol=1e-5))

    # 3-D [B, T, I] input handled as one lane-dense [B*T, I] slab in one call.
    d_seq = jax.random.uniform(k_seq, (2, 8, input_size),
                               minval=0.0, maxval=5.0, dtype=jnp.float32)
    for diag in (False, True):
        out = jax.block_until_ready(temporal_decay(d_seq, W, b, diag=diag))
        ref = _reference(d_seq, W, b, diag=diag)
        ok = ok and bool(jnp.allclose(out, ref, atol=1e-5, rtol=1e-5))

    # Larger, non-multiple row count exercising the tiled + padded grid path.
    d_big = jax.random.uniform(k_d, (272, input_size),
                               minval=0.0, maxval=5.0, dtype=jnp.float32)
    out = jax.block_until_ready(
        temporal_decay(d_big, W, b, diag=False, block_rows=128))
    ref = _reference(d_big, W, b, diag=False)
    ok = ok and bool(jnp.allclose(out, ref, atol=1e-5, rtol=1e-5))

    print("KERNEL_OK" if ok else "MISMATCH")
</pallas_src>

<mosaic_0001>
module attributes {stable_mosaic.version = 11 : i64} {
  func.func @_td_matmul_kernel(%arg0: i32, %arg1: memref<8x32xf32, #tpu.memory_space<vmem>>, %arg2: memref<32x32xf32, #tpu.memory_space<vmem>>, %arg3: memref<1x32xf32, #tpu.memory_space<vmem>>, %arg4: memref<8x32xf32, #tpu.memory_space<vmem>>) attributes {dimension_semantics = [#tpu.dimension_semantics<parallel>], iteration_bounds = array<i64: 1>, scalar_prefetch = 0 : i64, scratch_operands = 0 : i64, tpu.core_type = #tpu.core_type<tc>, window_params = [{transform_indices = @transform_0, window_bounds = array<i64: 8, 32>}, {pipeline_mode = #tpu.pipeline_mode<synchronous>, transform_indices = @transform_1, window_bounds = array<i64: 32, 32>}, {pipeline_mode = #tpu.pipeline_mode<synchronous>, transform_indices = @transform_2, window_bounds = array<i64: 1, 32>}, {transform_indices = @transform_3, window_bounds = array<i64: 8, 32>}]} {
    %c0 = arith.constant 0 : index
    %c0_0 = arith.constant 0 : index
    %0 = vector.load %arg1[%c0, %c0_0] : memref<8x32xf32, #tpu.memory_space<vmem>>, vector<8x32xf32>
    %c0_1 = arith.constant 0 : index
    %c0_2 = arith.constant 0 : index
    %1 = vector.load %arg2[%c0_1, %c0_2] : memref<32x32xf32, #tpu.memory_space<vmem>>, vector<32x32xf32>
    %cst = arith.constant dense<0.000000e+00> : vector<8x32xf32>
    %2 = tpu.matmul %0, %1, %cst {dimension_numbers = #tpu.dot_dimension_numbers<[1], [1], [0], [0], [0, 0, 1, 0], [], []>} : vector<8x32xf32>, vector<32x32xf32>, vector<8x32xf32> -> vector<8x32xf32>
    %c0_3 = arith.constant 0 : index
    %c0_4 = arith.constant 0 : index
    %3 = vector.load %arg3[%c0_3, %c0_4] : memref<1x32xf32, #tpu.memory_space<vmem>>, vector<1x32xf32>
    %4 = vector.broadcast %3 : vector<1x32xf32> to vector<8x32xf32>
    %5 = arith.addf %2, %4 : vector<8x32xf32>
    %cst_5 = arith.constant 0.000000e+00 : f32
    %6 = vector.broadcast %cst_5 : f32 to vector<8x32xf32>
    %7 = arith.maximumf %5, %6 : vector<8x32xf32>
    %cst_6 = arith.constant 0.000000e+00 : f32
    %8 = vector.broadcast %cst_6 : f32 to vector<8x32xf32>
    %9 = arith.subf %8, %7 : vector<8x32xf32>
    %10 = math.exp %9 : vector<8x32xf32>
    %c0_7 = arith.constant 0 : index
    %c0_8 = arith.constant 0 : index
    %11 = vector.load %arg4[%c0_7, %c0_8] : memref<8x32xf32, #tpu.memory_space<vmem>>, vector<8x32xf32>
    tpu.vector_store %arg4[%c0_7, %c0_8], %10 {strides = array<i32>} : memref<8x32xf32, #tpu.memory_space<vmem>>, vector<8x32xf32>,
    return
  }
  func.func @transform_0(%arg0: i32) -> (i32, i32) {
    %c0_i32 = arith.constant 0 : i32
    %c0_i32_0 = arith.constant 0 : i32
    return %arg0, %c0_i32 : i32, i32
  }
  func.func @transform_1(%arg0: i32) -> (i32, i32) {
    %c0_i32 = arith.constant 0 : i32
    %c0_i32_0 = arith.constant 0 : i32
    %c0_i32_1 = arith.constant 0 : i32
    return %c0_i32, %c0_i32_0 : i32, i32
  }
  func.func @transform_2(%arg0: i32) -> (i32, i32) {
    %c0_i32 = arith.constant 0 : i32
    %c0_i32_0 = arith.constant 0 : i32
    %c0_i32_1 = arith.constant 0 : i32
    return %c0_i32, %c0_i32_0 : i32, i32
  }
  func.func @transform_3(%arg0: i32) -> (i32, i32) {
    %c0_i32 = arith.constant 0 : i32
    %c0_i32_0 = arith.constant 0 : i32
    return %arg0, %c0_i32 : i32, i32
  }
}

</mosaic_0001>

<llo_original>
// kernel: tpu_custom_call.1
$region0: #{tpu_custom_call.1}
  #allocation0 [shape = 'u32[]', space=smem, size = 0x4, offset = 0x4, fixed_abs, tag = 'smem constant byte address 0x4 - core index']
  #allocation1 [shape = 'u32[144,128]{1,0:T(1,128)}', space=vmem, size = 0x12000, scoped, tag = 'internal scratch']
  %s0 = inlined_call_operand.hbm [shape: f32[8,32], index: 0, kind: input, shape index: {}]
  %s1 = inlined_call_operand.hbm [shape: f32[32,32], index: 1, kind: input, shape index: {}]
  %s2 = inlined_call_operand.hbm [shape: f32[1,32], index: 2, kind: input, shape index: {}]
  %s3 = inlined_call_operand.hbm [shape: f32[8,32], index: 3, kind: output, shape index: {}]
  %s4 = sld [smem:[#allocation0]]
  $region34: #{tpu_custom_call.1} parent=0
    _
  %s6 = ssub.s32 1, %s4
  %s7 = scalar_select 0, %s6, %s4
  $region1: #{tpu_custom_call.1} parent=0
    #allocation2 [shape = 'u8[4096]{0}', space=vmem, size = 0x1000, scoped, tag = 'input window, operand 0, single buffered']
    #allocation3 [shape = 's32[1]{0}', space=sflag, size = 0x4, scoped, tag = 'scoped memory for tpu_custom_call.1']
    #allocation4 [shape = 's32[1]{0}', space=sflag, size = 0x4, scoped, tag = 'scoped memory for tpu_custom_call.1']
    #allocation5 [shape = 'u8[16384]{0}', space=vmem, size = 0x4000, scoped, tag = 'input window, operand 1, single buffered']
    #allocation6 [shape = 's32[1]{0}', space=sflag, size = 0x4, scoped, tag = 'scoped memory for tpu_custom_call.1']
    #allocation7 [shape = 'u8[512]{0}', space=vmem, size = 0x400, scoped, tag = 'input window, operand 2, single buffered']
    #allocation8 [shape = 'u8[4096]{0}', space=vmem, size = 0x1000, scoped, tag = 'output window, operand 0, single buffered']
    %8 = vsyncpa [#allocation3], 0
    %9 = vsyncpa [#allocation6], 0
    %10 = vsyncpa [#allocation4], 0
    // Predicated region
    $region2: #{tpu_custom_call.1} parent=1 // pred_check
      _
    $region3: #{tpu_custom_call.1} parent=1 // pred_check_branch
      %12 = sbr.rel (0) target = $region5
    $region4: #{tpu_custom_call.1} parent=1 // pred_region
      %s14 = ssub.s32 128, 128
      %15 = vsyncadd [#allocation3], %s14
      %s17 = sshll.u32 [#allocation2], 4
      %s18 = int_to_ptr.vmem [resolvable:$true] %s17
      %20 = dma.hbm_to_vmem [thread:$0]  %s0, 128, %s18, [#allocation3]
    $region5: #{tpu_custom_call.1} parent=1 // pred_fallthru
      _
    // Predicated region
    $region6: #{tpu_custom_call.1} parent=1 // pred_check
      _
    $region7: #{tpu_custom_call.1} parent=1 // pred_check_branch
      %22 = sbr.rel (0) target = $region9
    $region8: #{tpu_custom_call.1} parent=1 // pred_region
      %s24 = ssub.s32 512, 512
      %25 = vsyncadd [#allocation6], %s24
      %s26 = sshll.u32 [#allocation5], 4
      %s27 = int_to_ptr.vmem [resolvable:$true] %s26
      %32 = dma.hbm_to_vmem [thread:$0]  %s1, 512, %s27, [#allocation6], 128, 128, 8
    $region9: #{tpu_custom_call.1} parent=1 // pred_fallthru
      _
    // Predicated region
    $region10: #{tpu_custom_call.1} parent=1 // pred_check
      _
    $region11: #{tpu_custom_call.1} parent=1 // pred_check_branch
      %34 = sbr.rel (0) target = $region13
    $region12: #{tpu_custom_call.1} parent=1 // pred_region
      %s36 = ssub.s32 16, 16
      %37 = vsyncadd [#allocation6], %s36
      %s39 = sshll.u32 [#allocation7], 4
      %s40 = int_to_ptr.vmem [resolvable:$true] %s39
      %42 = dma.hbm_to_vmem [thread:$0]  %s2, 16, %s40, [#allocation6]
    $region13: #{tpu_custom_call.1} parent=1 // pred_fallthru
      _
    // Predicated region
    $region14: #{tpu_custom_call.1} parent=1 // pred_check
      _
    $region15: #{tpu_custom_call.1} parent=1 // pred_check_branch
      %44 = sbr.rel (0) target = $region17
    $region16: #{tpu_custom_call.1} parent=1 // pred_region
      %45 = dma.done [#allocation3], 128
    $region17: #{tpu_custom_call.1} parent=1 // pred_fallthru
      _
    // Predicated region
    $region18: #{tpu_custom_call.1} parent=1 // pred_check
      _
    $region19: #{tpu_custom_call.1} parent=1 // pred_check_branch
      %47 = sbr.rel (0) target = $region21
    $region20: #{tpu_custom_call.1} parent=1 // pred_region
      %48 = dma.done [#allocation6], 512
    $region21: #{tpu_custom_call.1} parent=1 // pred_fallthru
      _
    // Predicated region
    $region22: #{tpu_custom_call.1} parent=1 // pred_check
      _
    $region23: #{tpu_custom_call.1} parent=1 // pred_check_branch
      %50 = sbr.rel (0) target = $region25
    $region24: #{tpu_custom_call.1} parent=1 // pred_region
      %51 = dma.done [#allocation6], 16
    $region25: #{tpu_custom_call.1} parent=1 // pred_fallthru
      _
    %v52 = vld [vmem:[#allocation2] sm:$0xff]
    %v53 = vld [vmem:[#allocation5] sm:$0xff]
    %v54 = vld [vmem:[#allocation5 + $0x8] sm:$0xff]
    %v55 = vld [vmem:[#allocation5 + $0x10] sm:$0xff]
    %v56 = vld [vmem:[#allocation5 + $0x18] sm:$0xff]
    %v57 = vld [vmem:[#allocation7] sm:$0x1]
    %v59 = vlaneseq
    %v60 = vshrl.u32 %v59, 7
    %v61 = vsub.s32 0, %v60
    %v62 = vrot.slane %v57, %v61
    %vm64 = vcmask 261120
    %v66 = vsel %vm64, %v52, 0
    %v69 = vsel %vm64, %v53, 0
    %v72 = vsel %vm64, %v54, 0
    %v75 = vsel %vm64, %v55, 0
    %v78 = vsel %vm64, %v56, 0
    %80 = vmatprep.subr.mxu0 0.0
    %81 = vmatpush1.xpose.msra.mxu0 %v69
    %82 = vmatprep.subr.mxu0 0.0
    %83 = vmatpush1.xpose.msra.mxu0 %v72
    %84 = vmatprep.subr.mxu0 0.0
    %85 = vmatpush1.xpose.msra.mxu0 %v75
    %86 = vmatprep.subr.mxu0 0.0
    %87 = vmatpush1.xpose.msra.mxu0 %v78
    %88 = vmatprep.subr.mxu0 0.0
    %89 = vmatpush1.xpose.msra.mxu0 0.0
    %90 = vmatprep.subr.mxu0 0.0
    %91 = vmatpush1.xpose.msra.mxu0 0.0
    %92 = vmatprep.subr.mxu0 0.0
    %93 = vmatpush1.xpose.msra.mxu0 0.0
    %94 = vmatprep.subr.mxu0 0.0
    %95 = vmatpush1.xpose.msra.mxu0 0.0
    %96 = vmatprep.subr.mxu0 0.0
    %97 = vmatpush1.xpose.msra.mxu0 0.0
    %98 = vmatprep.subr.mxu0 0.0
    %99 = vmatpush1.xpose.msra.mxu0 0.0
    %100 = vmatprep.subr.mxu0 0.0
    %101 = vmatpush1.xpose.msra.mxu0 0.0
    %102 = vmatprep.subr.mxu0 0.0
    %103 = vmatpush1.xpose.msra.mxu0 0.0
    %104 = vmatprep.subr.mxu0 0.0
    %105 = vmatpush1.xpose.msra.mxu0 0.0
    %106 = vmatprep.subr.mxu0 0.0
    %107 = vmatpush1.xpose.msra.mxu0 0.0
    %108 = vmatprep.subr.mxu0 0.0
    %109 = vmatpush1.xpose.msra.mxu0 0.0
    %110 = vmatprep.subr.mxu0 0.0
    %111 = vmatpush1.xpose.msra.mxu0 0.0
    %112 = vmatprep.subr.mxu0 0.0
    %113 = vmatpush1.xpose.msra.mxu0 0.0
    %114 = vmatprep.subr.mxu0 0.0
    %115 = vmatpush1.xpose.msra.mxu0 0.0
    %116 = vmatprep.subr.mxu0 0.0
    %117 = vmatpush1.xpose.msra.mxu0 0.0
    %118 = vmatprep.subr.mxu0 0.0
    %119 = vmatpush1.xpose.msra.mxu0 0.0
    %120 = vmatprep.subr.mxu0 0.0
    %121 = vmatpush1.xpose.msra.mxu0 0.0
    %122 = vmatprep.subr.mxu0 0.0
    %123 = vmatpush1.xpose.msra.mxu0 0.0
    %124 = vmatprep.subr.mxu0 0.0
    %125 = vmatpush1.xpose.msra.mxu0 0.0
    %126 = vmatprep.subr.mxu0 0.0
    %127 = vmatpush1.xpose.msra.mxu0 0.0
    %128 = vmatprep.subr.mxu0 0.0
    %129 = vmatpush1.xpose.msra.mxu0 0.0
    %130 = vmatprep.subr.mxu0 0.0
    %131 = vmatpush1.xpose.msra.mxu0 0.0
    %132 = vmatprep.subr.mxu0 0.0
    %133 = vmatpush1.xpose.msra.mxu0 0.0
    %134 = vmatprep.subr.mxu0 0.0
    %135 = vmatpush1.xpose.msra.mxu0 0.0
    %136 = vmatprep.subr.mxu0 0.0
    %137 = vmatpush1.xpose.msra.mxu0 0.0
    %138 = vmatprep.subr.mxu0 0.0
    %139 = vmatpush1.xpose.msra.mxu0 0.0
    %140 = vmatprep.subr.mxu0 0.0
    %141 = vmatpush1.xpose.msra.mxu0 0.0
    %142 = vmatprep.subr.mxu0 0.0
    %143 = vmatpush1.xpose.msra.mxu0 0.0
    %144 = vmatprep.mubr.f32.mxu0 0.0
    %145 = vmatmul.mubr.f32.gmra.mrb[0].mxu0 %v66
    %v146 = vpop.f32.mrb[0].mxu0
    %v147 = vadd.f32 %v62, %v146
    %v148 = vpop.f32.mrb[0].mxu0
    %149 = vdwg.mxu0
    %v150 = vmax.f32 %v147, 0.0
    %v151 = vsub.f32 0.0, %v150
    %v152 = vmul.f32 %v151, 1.442695
    %v153 = vpow.pop %v152
    %154 = vst.msk [vmem:[#allocation8] sm:$0xff] %vm64, %v153
    // Predicated region
    $region26: #{tpu_custom_call.1} parent=1 // pred_check
      _
    $region27: #{tpu_custom_call.1} parent=1 // pred_check_branch
      %156 = sbr.rel (0) target = $region29
    $region28: #{tpu_custom_call.1} parent=1 // pred_region
      %s158 = ssub.s32 128, 128
      %159 = vsyncadd [#allocation4], %s158
      %s161 = sshll.u32 [#allocation8], 4
      %s162 = int_to_ptr.vmem [resolvable:$true] %s161
      %164 = dma.vmem_to_hbm [thread:$0]  %s162, 128, %s3, [#allocation4]
    $region29: #{tpu_custom_call.1} parent=1 // pred_fallthru
      _
    // Predicated region
    $region30: #{tpu_custom_call.1} parent=1 // pred_check
      _
    $region31: #{tpu_custom_call.1} parent=1 // pred_check_branch
      %166 = sbr.rel (0) target = $region33
    $region32: #{tpu_custom_call.1} parent=1 // pred_region
      %167 = dma.done [#allocation4], 128
    $region33: #{tpu_custom_call.1} parent=1 // pred_fallthru
      _
    %168 = vsyncpa [#allocation3], 1
    %169 = vsyncpa [#allocation6], 1
    %170 = vsyncpa [#allocation4], 1

</llo_original>
